<compile_context>
chip_gen: v6e
topology: v6e:2x2x1
jax: 0.10.0
libtpu: 0.0.40
codegen_flags: <defaults>
</compile_context>

<pallas_src>
import jax
import jax.numpy as jnp
from jax.experimental import pallas as pl
from jax.experimental.pallas import tpu as pltpu

_S = 16  # 4x4 spatial positions


def _disc_last_block_kernel(x_ref, w1_ref, b1_ref, w2_ref, b2_ref, out_ref):
    Bt, S, K = x_ref.shape          # batch tile, 16 spatial positions, C*9 features
    C = w1_ref.shape[1]

    # conv1 as a single MXU matmul over the im2col patches of the whole batch tile.
    # Rows are ordered (batch, spatial); merging the leading dims is layout-free
    # because S (=16) is a multiple of the sublane tile.
    x2 = x_ref[...].reshape(Bt * S, K)                                   # bf16
    h = jnp.dot(x2, w1_ref[...], preferred_element_type=jnp.float32)    # (Bt*S, C) f32
    h = h + b1_ref[...]                                                  # bias (1, C)
    h = jnp.maximum(h, 0.2 * h)                                          # LeakyReLU(0.2)

    # conv2 (4x4 kernel over the full 4x4 map) == per-batch weighted sum over
    # (spatial, channel) on the VPU + sublane/lane reductions (XLU).
    h3 = h.reshape(Bt, S, C)                                             # free split
    weighted = h3 * w2_ref[...].reshape(1, S, C)                         # broadcast b
    acc = jnp.sum(weighted, axis=1)                                      # (Bt, C)
    out = jnp.sum(acc, axis=1, keepdims=True) + b2_ref[...]              # (Bt, 1)
    out_ref[...] = out.astype(out_ref.dtype)


def _pick_block_b(B, K):
    """Batch tile: multiple of 16, capped so the bf16 activation slab stays ~<=2MiB."""
    cap = ((2 * 1024 * 1024) // (_S * K * 2)) // 16 * 16
    cap = max(16, min(256, cap))
    need = ((B + 15) // 16) * 16
    return min(cap, need)


def discriminator_last_block(x, w1, b1, w2, b2, *, block_b=None):
    """x: (B, C, 4, 4) float32, params as in nn.Conv2d (OIHW). Returns (B, 1)."""
    B, C, H, W = x.shape
    assert (H, W) == (4, 4), "last block expects a 4x4 feature map"
    S = _S
    K = C * 9

    if block_b is None:
        block_b = _pick_block_b(B, K)
    assert block_b % 16 == 0, "batch tile must be a multiple of 16"

    # Pad batch up to a multiple of the batch tile; padded rows are sliced off later.
    Bp = ((B + block_b - 1) // block_b) * block_b

    # im2col for the 3x3 / pad=1 conv, laid out batch-major:
    #   x_col[b, s, :] = patch at output position s = h*4+w, features = (c, kh, kw)
    xp = jnp.pad(jnp.asarray(x, jnp.float32),
                 ((0, Bp - B), (0, 0), (1, 1), (1, 1)))                  # (Bp, C, 6, 6)
    patches = [xp[:, :, i:i + 3, j:j + 3].reshape(Bp, K)
               for i in range(4) for j in range(4)]
    x_col = jnp.stack(patches, axis=1).astype(jnp.bfloat16)              # (Bp, 16, K)

    # conv1 weights: (C, C, 3, 3) -> (K, C); bf16 for native MXU throughput.
    w1_mat = jnp.asarray(w1, jnp.float32).reshape(C, K).T.astype(jnp.bfloat16)
    b1_row = jnp.asarray(b1, jnp.float32).reshape(1, C)
    # conv2 weights: (1, C, 4, 4) -> (16, C): rows = spatial (h*4+w), cols = channel.
    w2_mat = jnp.asarray(w2, jnp.float32)[0].reshape(C, S).T
    b2_mat = jnp.asarray(b2, jnp.float32).reshape(1, 1)

    grid = (Bp // block_b,)
    flops = 2 * Bp * S * K * C + 5 * Bp * S * C
    bytes_accessed = (x_col.size * 2 + w1_mat.size * 2
                      + (b1_row.size + w2_mat.size + b2_mat.size + Bp) * 4)

    # VMEM budget: double-buffered activation slab + resident weights + intermediates.
    x_blk_bytes = block_b * S * K * 2
    w_bytes = K * C * 2 + (C + S * C + 1) * 4
    interm_bytes = 2 * block_b * S * C * 4
    need = 2 * x_blk_bytes + w_bytes + interm_bytes + 2 * block_b * 4
    vmem_limit = int(min(64 * 2**20, max(32 * 2**20, 2 * need)))

    out = pl.pallas_call(
        _disc_last_block_kernel,
        out_shape=jax.ShapeDtypeStruct((Bp, 1), jnp.float32),
        grid_spec=pltpu.PrefetchScalarGridSpec(
            num_scalar_prefetch=0,
            grid=grid,
            in_specs=[
                pl.BlockSpec((block_b, S, K), lambda i: (i, 0, 0)),  # streamed x_col
                pl.BlockSpec((K, C), lambda i: (0, 0)),              # resident w1
                pl.BlockSpec((1, C), lambda i: (0, 0)),              # resident b1
                pl.BlockSpec((S, C), lambda i: (0, 0)),              # resident w2
                pl.BlockSpec((1, 1), lambda i: (0, 0)),              # resident b2
            ],
            out_specs=pl.BlockSpec((block_b, 1), lambda i: (i, 0)),
        ),
        compiler_params=pltpu.CompilerParams(
            dimension_semantics=("parallel",),
            vmem_limit_bytes=vmem_limit),
        cost_estimate=pl.CostEstimate(flops=flops, transcendentals=0,
                                      bytes_accessed=bytes_accessed),
    )(x_col, w1_mat, b1_row, w2_mat, b2_mat)
    return out[:B]


def _reference(x, w1, b1, w2, b2):
    """Pure-JAX reference reproducing the PyTorch module (f32, HIGHEST precision)."""
    y = jax.lax.conv_general_dilated(
        x, w1, window_strides=(1, 1), padding=((1, 1), (1, 1)),
        dimension_numbers=('NCHW', 'OIHW', 'NCHW'),
        precision=jax.lax.Precision.HIGHEST,
        preferred_element_type=jnp.float32)
    y = y + b1.reshape(1, -1, 1, 1)
    y = jnp.where(y > 0, y, 0.2 * y)
    z = jax.lax.conv_general_dilated(
        y, w2, window_strides=(1, 1), padding='VALID',
        dimension_numbers=('NCHW', 'OIHW', 'NCHW'),
        precision=jax.lax.Precision.HIGHEST,
        preferred_element_type=jnp.float32)
    z = z + b2.reshape(1, -1, 1, 1)
    return z.reshape(z.shape[0], -1)


if __name__ == "__main__":
    B, C = 8, 32
    key = jax.random.PRNGKey(0)
    kx, k1, kb1, k2, kb2 = jax.random.split(key, 5)

    x = jax.random.normal(kx, (B, C, 4, 4), dtype=jnp.float32)
    # deterministic synthetic parameters (shapes from nn.Conv2d definitions, OIHW)
    w1 = jax.random.normal(k1, (C, C, 3, 3), dtype=jnp.float32) * 0.1
    b1 = jax.random.normal(kb1, (C,), dtype=jnp.float32) * 0.1
    w2 = jax.random.normal(k2, (1, C, 4, 4), dtype=jnp.float32) * 0.1
    b2 = jax.random.normal(kb2, (1,), dtype=jnp.float32) * 0.1

    out = jax.block_until_ready(discriminator_last_block(x, w1, b1, w2, b2))
    ref = _reference(x, w1, b1, w2, b2)

    assert out.shape == (B, 1), out.shape
    # bf16 MXU inputs (f32 accumulation) -> slightly looser tolerance vs f32 reference
    assert jnp.allclose(out, ref, rtol=5e-2, atol=5e-2), (out, ref)

    print("KERNEL_OK")
</pallas_src>

<mosaic_0001>
module attributes {stable_mosaic.version = 11 : i64} {
  func.func @_disc_last_block_kernel(%arg0: i32, %arg1: memref<16x16x288xbf16, #tpu.memory_space<vmem>>, %arg2: memref<288x32xbf16, #tpu.memory_space<vmem>>, %arg3: memref<1x32xf32, #tpu.memory_space<vmem>>, %arg4: memref<16x32xf32, #tpu.memory_space<vmem>>, %arg5: memref<1x1xf32, #tpu.memory_space<vmem>>, %arg6: memref<16x1xf32, #tpu.memory_space<vmem>>) attributes {dimension_semantics = [#tpu.dimension_semantics<parallel>], iteration_bounds = array<i64: 1>, scalar_prefetch = 0 : i64, scratch_operands = 0 : i64, tpu.core_type = #tpu.core_type<tc>, window_params = [{transform_indices = @transform_0, window_bounds = array<i64: 16, 16, 288>}, {pipeline_mode = #tpu.pipeline_mode<synchronous>, transform_indices = @transform_1, window_bounds = array<i64: 288, 32>}, {pipeline_mode = #tpu.pipeline_mode<synchronous>, transform_indices = @transform_2, window_bounds = array<i64: 1, 32>}, {pipeline_mode = #tpu.pipeline_mode<synchronous>, transform_indices = @transform_3, window_bounds = array<i64: 16, 32>}, {pipeline_mode = #tpu.pipeline_mode<synchronous>, transform_indices = @transform_4, window_bounds = array<i64: 1, 1>}, {transform_indices = @transform_5, window_bounds = array<i64: 16, 1>}]} {
    %c0 = arith.constant 0 : index
    %c0_0 = arith.constant 0 : index
    %c0_1 = arith.constant 0 : index
    %0 = vector.load %arg1[%c0, %c0_0, %c0_1] : memref<16x16x288xbf16, #tpu.memory_space<vmem>>, vector<16x16x288xbf16>
    %1 = vector.shape_cast %0 : vector<16x16x288xbf16> to vector<256x288xbf16>
    %c0_2 = arith.constant 0 : index
    %c0_3 = arith.constant 0 : index
    %2 = vector.load %arg2[%c0_2, %c0_3] : memref<288x32xbf16, #tpu.memory_space<vmem>>, vector<288x32xbf16>
    %cst = arith.constant dense<0.000000e+00> : vector<256x32xf32>
    %3 = tpu.matmul %1, %2, %cst {dimension_numbers = #tpu.dot_dimension_numbers<[1], [0], [0], [1], [0, 0, 1, 1], [], []>} : vector<256x288xbf16>, vector<288x32xbf16>, vector<256x32xf32> -> vector<256x32xf32>
    %c0_4 = arith.constant 0 : index
    %c0_5 = arith.constant 0 : index
    %4 = vector.load %arg3[%c0_4, %c0_5] : memref<1x32xf32, #tpu.memory_space<vmem>>, vector<1x32xf32>
    %5 = vector.broadcast %4 : vector<1x32xf32> to vector<256x32xf32>
    %6 = arith.addf %3, %5 : vector<256x32xf32>
    %cst_6 = arith.constant 2.000000e-01 : f32
    %7 = vector.broadcast %cst_6 : f32 to vector<256x32xf32>
    %8 = arith.mulf %7, %6 : vector<256x32xf32>
    %9 = arith.maximumf %6, %8 : vector<256x32xf32>
    %10 = vector.shape_cast %9 : vector<256x32xf32> to vector<16x16x32xf32>
    %c0_7 = arith.constant 0 : index
    %c0_8 = arith.constant 0 : index
    %11 = vector.load %arg4[%c0_7, %c0_8] : memref<16x32xf32, #tpu.memory_space<vmem>>, vector<16x32xf32>
    %12 = vector.shape_cast %11 : vector<16x32xf32> to vector<1x16x32xf32>
    %13 = vector.broadcast %12 : vector<1x16x32xf32> to vector<16x16x32xf32>
    %14 = arith.mulf %10, %13 : vector<16x16x32xf32>
    %cst_9 = arith.constant dense<0.000000e+00> : vector<16x32xf32>
    %15 = vector.multi_reduction <add>, %14, %cst_9 [1] : vector<16x16x32xf32> to vector<16x32xf32>
    %cst_10 = arith.constant dense<0.000000e+00> : vector<16xf32>
    %16 = vector.multi_reduction <add>, %15, %cst_10 [1] : vector<16x32xf32> to vector<16xf32>
    %17 = vector.shape_cast %16 : vector<16xf32> to vector<16x1xf32>
    %c0_11 = arith.constant 0 : index
    %c0_12 = arith.constant 0 : index
    %18 = vector.load %arg5[%c0_11, %c0_12] : memref<1x1xf32, #tpu.memory_space<vmem>>, vector<1x1xf32>
    %19 = vector.broadcast %18 : vector<1x1xf32> to vector<16x1xf32>
    %20 = arith.addf %17, %19 : vector<16x1xf32>
    %c0_13 = arith.constant 0 : index
    %c0_14 = arith.constant 0 : index
    %21 = vector.load %arg6[%c0_13, %c0_14] : memref<16x1xf32, #tpu.memory_space<vmem>>, vector<16x1xf32>
    tpu.vector_store %arg6[%c0_13, %c0_14], %20 {strides = array<i32>} : memref<16x1xf32, #tpu.memory_space<vmem>>, vector<16x1xf32>,
    return
  }
  func.func @transform_0(%arg0: i32) -> (i32, i32, i32) {
    %c0_i32 = arith.constant 0 : i32
    %c0_i32_0 = arith.constant 0 : i32
    %c0_i32_1 = arith.constant 0 : i32
    return %arg0, %c0_i32, %c0_i32_0 : i32, i32, i32
  }
  func.func @transform_1(%arg0: i32) -> (i32, i32) {
    %c0_i32 = arith.constant 0 : i32
    %c0_i32_0 = arith.constant 0 : i32
    %c0_i32_1 = arith.constant 0 : i32
    return %c0_i32, %c0_i32_0 : i32, i32
  }
  func.func @transform_2(%arg0: i32) -> (i32, i32) {
    %c0_i32 = arith.constant 0 : i32
    %c0_i32_0 = arith.constant 0 : i32
    %c0_i32_1 = arith.constant 0 : i32
    return %c0_i32, %c0_i32_0 : i32, i32
  }
  func.func @transform_3(%arg0: i32) -> (i32, i32) {
    %c0_i32 = arith.constant 0 : i32
    %c0_i32_0 = arith.constant 0 : i32
    %c0_i32_1 = arith.constant 0 : i32
    return %c0_i32, %c0_i32_0 : i32, i32
  }
  func.func @transform_4(%arg0: i32) -> (i32, i32) {
    %c0_i32 = arith.constant 0 : i32
    %c0_i32_0 = arith.constant 0 : i32
    %c0_i32_1 = arith.constant 0 : i32
    return %c0_i32, %c0_i32_0 : i32, i32
  }
  func.func @transform_5(%arg0: i32) -> (i32, i32) {
    %c0_i32 = arith.constant 0 : i32
    %c0_i32_0 = arith.constant 0 : i32
    return %arg0, %c0_i32 : i32, i32
  }
}

</mosaic_0001>

<llo_original>
// kernel: tpu_custom_call.1
$region0: #{tpu_custom_call.1}
  #allocation0 [shape = 'u32[]', space=smem, size = 0x4, offset = 0x4, fixed_abs, tag = 'smem constant byte address 0x4 - core index']
  #allocation1 [shape = 'u32[144,128]{1,0:T(1,128)}', space=vmem, size = 0x12000, scoped, tag = 'internal scratch']
  #allocation2 [shape = 'f32[1,1]{1,0:T(1,128)S(1)}', space=vmem, size = 0x200, scoped, tag = 'scoped memory for tpu_custom_call.1']
  %s0 = inlined_call_operand.hbm [shape: bf16[16,16,288], index: 0, kind: input, shape index: {}]
  %s1 = inlined_call_operand.vmem [shape: bf16[288,32], index: 1, kind: input, shape index: {}]
  %s2 = inlined_call_operand.vmem [shape: f32[1,32], index: 2, kind: input, shape index: {}]
  %s3 = inlined_call_operand.vmem [shape: f32[16,32], index: 3, kind: input, shape index: {}]
  %s4 = inlined_call_operand.<no memory space> [shape: f32[1,1], index: 4, kind: input, shape index: {}]
  %s5 = inlined_call_operand.vmem [shape: f32[16,1], index: 5, kind: output, shape index: {}]
  %s6 = sld [smem:[#allocation0]]
  $region34: #{tpu_custom_call.1} parent=0
    _
  %s8 = ssub.s32 1, %s6
  %s9 = scalar_select 0, %s8, %s6
  %v10 = vstv %s4
  %11 = vst [vmem:[#allocation2] sm:$0x1] %v10
  $region1: #{tpu_custom_call.1} parent=0
    #allocation3 [shape = 'u8[196608]{0}', space=vmem, size = 0x30000, scoped, tag = 'input window, operand 0, single buffered']
    #allocation4 [shape = 's32[1]{0}', space=sflag, size = 0x4, scoped, tag = 'scoped memory for tpu_custom_call.1']
    %12 = vsyncpa [#allocation4], 0
    // Predicated region
    $region2: #{tpu_custom_call.1} parent=1 // pred_check
      _
    $region3: #{tpu_custom_call.1} parent=1 // pred_check_branch
      %14 = sbr.rel (0) target = $region5
    $region4: #{tpu_custom_call.1} parent=1 // pred_region
      %s16 = ssub.s32 6144, 6144
      %17 = vsyncadd [#allocation4], %s16
      %s18 = sshll.u32 [#allocation3], 4
      %s19 = int_to_ptr.vmem [resolvable:$true] %s18
      %24 = dma.hbm_to_vmem [thread:$0]  %s0, 6144, %s19, [#allocation4], 192, 192, 12
    $region5: #{tpu_custom_call.1} parent=1 // pred_fallthru
      _
    // Predicated region
    $region6: #{tpu_custom_call.1} parent=1 // pred_check
      _
    $region7: #{tpu_custom_call.1} parent=1 // pred_check_branch
      %26 = sbr.rel (0) target = $region9
    $region8: #{tpu_custom_call.1} parent=1 // pred_region
      _
    $region9: #{tpu_custom_call.1} parent=1 // pred_fallthru
      _
    // Predicated region
    $region10: #{tpu_custom_call.1} parent=1 // pred_check
      _
    $region11: #{tpu_custom_call.1} parent=1 // pred_check_branch
      %28 = sbr.rel (0) target = $region13
    $region12: #{tpu_custom_call.1} parent=1 // pred_region
      _
    $region13: #{tpu_custom_call.1} parent=1 // pred_fallthru
      _
    // Predicated region
    $region14: #{tpu_custom_call.1} parent=1 // pred_check
      _
    $region15: #{tpu_custom_call.1} parent=1 // pred_check_branch
      %30 = sbr.rel (0) target = $region17
    $region16: #{tpu_custom_call.1} parent=1 // pred_region
      _
    $region17: #{tpu_custom_call.1} parent=1 // pred_fallthru
      _
    // Predicated region
    $region18: #{tpu_custom_call.1} parent=1 // pred_check
      _
    $region19: #{tpu_custom_call.1} parent=1 // pred_check_branch
      %32 = sbr.rel (0) target = $region21
    $region20: #{tpu_custom_call.1} parent=1 // pred_region
      _
    $region21: #{tpu_custom_call.1} parent=1 // pred_fallthru
      _
    // Predicated region
    $region22: #{tpu_custom_call.1} parent=1 // pred_check
      _
    $region23: #{tpu_custom_call.1} parent=1 // pred_check_branch
      %34 = sbr.rel (0) target = $region25
    $region24: #{tpu_custom_call.1} parent=1 // pred_region
      %35 = dma.done [#allocation4], 6144
    $region25: #{tpu_custom_call.1} parent=1 // pred_fallthru
      _
    %v37 = vld [vmem:[#allocation3] sm:$0xff]
    %v38 = vld [vmem:[#allocation3 + $0x8] sm:$0xf]
    %v39 = vld [vmem:[#allocation3 + $0xc] sm:$0xff]
    %v40 = vld [vmem:[#allocation3 + $0x14] sm:$0xf]
    %v41 = vld [vmem:[#allocation3 + $0x18] sm:$0xff]
    %v42 = vld [vmem:[#allocation3 + $0x20] sm:$0xf]
    %v43 = vld [vmem:[#allocation3 + $0x24] sm:$0xff]
    %v44 = vld [vmem:[#allocation3 + $0x2c] sm:$0xf]
    %v45 = vld [vmem:[#allocation3 + $0x30] sm:$0xff]
    %v46 = vld [vmem:[#allocation3 + $0x38] sm:$0xf]
    %v47 = vld [vmem:[#allocation3 + $0x3c] sm:$0xff]
    %v48 = vld [vmem:[#allocation3 + $0x44] sm:$0xf]
    %v49 = vld [vmem:[#allocation3 + $0x48] sm:$0xff]
    %v50 = vld [vmem:[#allocation3 + $0x50] sm:$0xf]
    %v51 = vld [vmem:[#allocation3 + $0x54] sm:$0xff]
    %v52 = vld [vmem:[#allocation3 + $0x5c] sm:$0xf]
    %v53 = vld [vmem:[#allocation3 + $0x60] sm:$0xff]
    %v54 = vld [vmem:[#allocation3 + $0x68] sm:$0xf]
    %v55 = vld [vmem:[#allocation3 + $0x6c] sm:$0xff]
    %v56 = vld [vmem:[#allocation3 + $0x74] sm:$0xf]
    %v57 = vld [vmem:[#allocation3 + $0x78] sm:$0xff]
    %v58 = vld [vmem:[#allocation3 + $0x80] sm:$0xf]
    %v59 = vld [vmem:[#allocation3 + $0x84] sm:$0xff]
    %v60 = vld [vmem:[#allocation3 + $0x8c] sm:$0xf]
    %v61 = vld [vmem:[#allocation3 + $0x90] sm:$0xff]
    %v62 = vld [vmem:[#allocation3 + $0x98] sm:$0xf]
    %v63 = vld [vmem:[#allocation3 + $0x9c] sm:$0xff]
    %v64 = vld [vmem:[#allocation3 + $0xa4] sm:$0xf]
    %v65 = vld [vmem:[#allocation3 + $0xa8] sm:$0xff]
    %v66 = vld [vmem:[#allocation3 + $0xb0] sm:$0xf]
    %v67 = vld [vmem:[#allocation3 + $0xb4] sm:$0xff]
    %v68 = vld [vmem:[#allocation3 + $0xbc] sm:$0xf]
    %v69 = vld [vmem:[#allocation3 + $0xc0] sm:$0xff]
    %v70 = vld [vmem:[#allocation3 + $0xc8] sm:$0xf]
    %v71 = vld [vmem:[#allocation3 + $0xcc] sm:$0xff]
    %v72 = vld [vmem:[#allocation3 + $0xd4] sm:$0xf]
    %v73 = vld [vmem:[#allocation3 + $0xd8] sm:$0xff]
    %v74 = vld [vmem:[#allocation3 + $0xe0] sm:$0xf]
    %v75 = vld [vmem:[#allocation3 + $0xe4] sm:$0xff]
    %v76 = vld [vmem:[#allocation3 + $0xec] sm:$0xf]
    %v77 = vld [vmem:[#allocation3 + $0xf0] sm:$0xff]
    %v78 = vld [vmem:[#allocation3 + $0xf8] sm:$0xf]
    %v79 = vld [vmem:[#allocation3 + $0xfc] sm:$0xff]
    %v80 = vld [vmem:[#allocation3 + $0x104] sm:$0xf]
    %v81 = vld [vmem:[#allocation3 + $0x108] sm:$0xff]
    %v82 = vld [vmem:[#allocation3 + $0x110] sm:$0xf]
    %v83 = vld [vmem:[#allocation3 + $0x114] sm:$0xff]
    %v84 = vld [vmem:[#allocation3 + $0x11c] sm:$0xf]
    %v85 = vld [vmem:[#allocation3 + $0x120] sm:$0xff]
    %v86 = vld [vmem:[#allocation3 + $0x128] sm:$0xf]
    %v87 = vld [vmem:[#allocation3 + $0x12c] sm:$0xff]
    %v88 = vld [vmem:[#allocation3 + $0x134] sm:$0xf]
    %v89 = vld [vmem:[#allocation3 + $0x138] sm:$0xff]
    %v90 = vld [vmem:[#allocation3 + $0x140] sm:$0xf]
    %v91 = vld [vmem:[#allocation3 + $0x144] sm:$0xff]
    %v92 = vld [vmem:[#allocation3 + $0x14c] sm:$0xf]
    %v93 = vld [vmem:[#allocation3 + $0x150] sm:$0xff]
    %v94 = vld [vmem:[#allocation3 + $0x158] sm:$0xf]
    %v95 = vld [vmem:[#allocation3 + $0x15c] sm:$0xff]
    %v96 = vld [vmem:[#allocation3 + $0x164] sm:$0xf]
    %v97 = vld [vmem:[#allocation3 + $0x168] sm:$0xff]
    %v98 = vld [vmem:[#allocation3 + $0x170] sm:$0xf]
    %v99 = vld [vmem:[#allocation3 + $0x174] sm:$0xff]
    %v100 = vld [vmem:[#allocation3 + $0x17c] sm:$0xf]
    %v101 = vld [vmem:[%s1] sm:$0xf]
    %v102 = vld [vmem:[%s1 + $0x4] sm:$0xf]
    %v103 = vld [vmem:[%s1 + $0x8] sm:$0xf]
    %v104 = vld [vmem:[%s1 + $0xc] sm:$0xf]
    %v105 = vld [vmem:[%s1 + $0x10] sm:$0xf]
    %v106 = vld [vmem:[%s1 + $0x14] sm:$0xf]
    %v107 = vld [vmem:[%s1 + $0x18] sm:$0xf]
    %v108 = vld [vmem:[%s1 + $0x1c] sm:$0xf]
    %v109 = vld [vmem:[%s1 + $0x20] sm:$0xf]
    %v110 = vld [vmem:[%s1 + $0x24] sm:$0xf]
    %v111 = vld [vmem:[%s1 + $0x28] sm:$0xf]
    %v112 = vld [vmem:[%s1 + $0x2c] sm:$0xf]
    %v113 = vld [vmem:[%s1 + $0x30] sm:$0xf]
    %v114 = vld [vmem:[%s1 + $0x34] sm:$0xf]
    %v115 = vld [vmem:[%s1 + $0x38] sm:$0xf]
    %v116 = vld [vmem:[%s1 + $0x3c] sm:$0xf]
    %v117 = vld [vmem:[%s1 + $0x40] sm:$0xf]
    %v118 = vld [vmem:[%s1 + $0x44] sm:$0xf]
    %v119 = vld [vmem:[%s1 + $0x48] sm:$0xf]
    %v120 = vld [vmem:[%s1 + $0x4c] sm:$0xf]
    %v121 = vld [vmem:[%s1 + $0x50] sm:$0xf]
    %v122 = vld [vmem:[%s1 + $0x54] sm:$0xf]
    %v123 = vld [vmem:[%s1 + $0x58] sm:$0xf]
    %v124 = vld [vmem:[%s1 + $0x5c] sm:$0xf]
    %v125 = vld [vmem:[%s1 + $0x60] sm:$0xf]
    %v126 = vld [vmem:[%s1 + $0x64] sm:$0xf]
    %v127 = vld [vmem:[%s1 + $0x68] sm:$0xf]
    %v128 = vld [vmem:[%s1 + $0x6c] sm:$0xf]
    %v129 = vld [vmem:[%s1 + $0x70] sm:$0xf]
    %v130 = vld [vmem:[%s1 + $0x74] sm:$0xf]
    %v131 = vld [vmem:[%s1 + $0x78] sm:$0xf]
    %v132 = vld [vmem:[%s1 + $0x7c] sm:$0xf]
    %v133 = vld [vmem:[%s1 + $0x80] sm:$0xf]
    %v134 = vld [vmem:[%s1 + $0x84] sm:$0xf]
    %v135 = vld [vmem:[%s1 + $0x88] sm:$0xf]
    %v136 = vld [vmem:[%s1 + $0x8c] sm:$0xf]
    %v137 = vld [vmem:[%s2] sm:$0x1]
    %v139 = vlaneseq
    %v140 = vshrl.u32 %v139, 7
    %v141 = vsub.s32 0, %v140
    %v142 = vrot.slane %v137, %v141
    %v208 = vunpack.c.l.b16 %v37
    %v209 = vunpack.c.h.b16 %v37
    %v210 = vunpack.c.l.b16 %v38
    %v211 = vunpack.c.l.b16 %v39
    %v212 = vunpack.c.h.b16 %v39
    %v213 = vunpack.c.l.b16 %v40
    %v214 = vunpack.c.l.b16 %v41
    %v215 = vunpack.c.h.b16 %v41
    %v216 = vunpack.c.l.b16 %v42
    %v217 = vunpack.c.l.b16 %v43
    %v218 = vunpack.c.h.b16 %v43
    %v219 = vunpack.c.l.b16 %v44
    %v220 = vunpack.c.l.b16 %v45
    %v221 = vunpack.c.h.b16 %v45
    %v222 = vunpack.c.l.b16 %v46
    %v223 = vunpack.c.l.b16 %v47
    %v224 = vunpack.c.h.b16 %v47
    %v225 = vunpack.c.l.b16 %v48
    %v226 = vunpack.c.l.b16 %v49
    %v227 = vunpack.c.h.b16 %v49
    %v228 = vunpack.c.l.b16 %v50
    %v229 = vunpack.c.l.b16 %v51
    %v230 = vunpack.c.h.b16 %v51
    %v231 = vunpack.c.l.b16 %v52
    %v232 = vunpack.c.l.b16 %v53
    %v233 = vunpack.c.h.b16 %v53
    %v234 = vunpack.c.l.b16 %v54
    %v235 = vunpack.c.l.b16 %v55
    %v236 = vunpack.c.h.b16 %v55
    %v237 = vunpack.c.l.b16 %v56
    %v238 = vunpack.c.l.b16 %v57
    %v239 = vunpack.c.h.b16 %v57
    %v240 = vunpack.c.l.b16 %v58
    %v241 = vunpack.c.l.b16 %v59
    %v242 = vunpack.c.h.b16 %v59
    %v243 = vunpack.c.l.b16 %v60
    %v244 = vunpack.c.l.b16 %v61
    %v245 = vunpack.c.h.b16 %v61
    %v246 = vunpack.c.l.b16 %v62
    %v247 = vunpack.c.l.b16 %v63
    %v248 = vunpack.c.h.b16 %v63
    %v249 = vunpack.c.l.b16 %v64
    %v250 = vunpack.c.l.b16 %v65
    %v251 = vunpack.c.h.b16 %v65
    %v252 = vunpack.c.l.b16 %v66
    %v253 = vunpack.c.l.b16 %v67
    %v254 = vunpack.c.h.b16 %v67
    %v255 = vunpack.c.l.b16 %v68
    %v256 = vunpack.c.l.b16 %v69
    %v257 = vunpack.c.h.b16 %v69
    %v258 = vunpack.c.l.b16 %v70
    %v259 = vunpack.c.l.b16 %v71
    %v260 = vunpack.c.h.b16 %v71
    %v261 = vunpack.c.l.b16 %v72
    %v262 = vunpack.c.l.b16 %v73
    %v263 = vunpack.c.h.b16 %v73
    %v264 = vunpack.c.l.b16 %v74
    %v265 = vunpack.c.l.b16 %v75
    %v266 = vunpack.c.h.b16 %v75
    %v267 = vunpack.c.l.b16 %v76
    %v268 = vunpack.c.l.b16 %v77
    %v269 = vunpack.c.h.b16 %v77
    %v270 = vunpack.c.l.b16 %v78
    %v271 = vunpack.c.l.b16 %v79
    %v272 = vunpack.c.h.b16 %v79
    %v273 = vunpack.c.l.b16 %v80
    %v274 = vunpack.c.l.b16 %v81
    %v275 = vunpack.c.h.b16 %v81
    %v276 = vunpack.c.l.b16 %v82
    %v277 = vunpack.c.l.b16 %v83
    %v278 = vunpack.c.h.b16 %v83
    %v279 = vunpack.c.l.b16 %v84
    %v280 = vunpack.c.l.b16 %v85
    %v281 = vunpack.c.h.b16 %v85
    %v282 = vunpack.c.l.b16 %v86
    %v283 = vunpack.c.l.b16 %v87
    %v284 = vunpack.c.h.b16 %v87
    %v285 = vunpack.c.l.b16 %v88
    %v286 = vunpack.c.l.b16 %v89
    %v287 = vunpack.c.h.b16 %v89
    %v288 = vunpack.c.l.b16 %v90
    %v289 = vunpack.c.l.b16 %v91
    %v290 = vunpack.c.h.b16 %v91
    %v291 = vunpack.c.l.b16 %v92
    %v292 = vunpack.c.l.b16 %v93
    %v293 = vunpack.c.h.b16 %v93
    %v294 = vunpack.c.l.b16 %v94
    %v295 = vunpack.c.l.b16 %v95
    %v296 = vunpack.c.h.b16 %v95
    %v297 = vunpack.c.l.b16 %v96
    %v298 = vunpack.c.l.b16 %v97
    %v299 = vunpack.c.h.b16 %v97
    %v300 = vunpack.c.l.b16 %v98
    %v301 = vunpack.c.l.b16 %v99
    %v302 = vunpack.c.h.b16 %v99
    %v303 = vunpack.c.l.b16 %v100
    %v304 = vpack.c.b16 %v211, %v208
    %v305 = vpack.c.b16 %v212, %v209
    %v306 = vpack.c.b16 %v213, %v210
    %v307 = vpack.c.b16 %v217, %v214
    %v308 = vpack.c.b16 %v218, %v215
    %v309 = vpack.c.b16 %v219, %v216
    %v310 = vpack.c.b16 %v223, %v220
    %v311 = vpack.c.b16 %v224, %v221
    %v312 = vpack.c.b16 %v225, %v222
    %v313 = vpack.c.b16 %v229, %v226
    %v314 = vpack.c.b16 %v230, %v227
    %v315 = vpack.c.b16 %v231, %v228
    %v316 = vpack.c.b16 %v235, %v232
    %v317 = vpack.c.b16 %v236, %v233
    %v318 = vpack.c.b16 %v237, %v234
    %v319 = vpack.c.b16 %v241, %v238
    %v320 = vpack.c.b16 %v242, %v239
    %v321 = vpack.c.b16 %v243, %v240
    %v322 = vpack.c.b16 %v247, %v244
    %v323 = vpack.c.b16 %v248, %v245
    %v324 = vpack.c.b16 %v249, %v246
    %v325 = vpack.c.b16 %v253, %v250
    %v326 = vpack.c.b16 %v254, %v251
    %v327 = vpack.c.b16 %v255, %v252
    %v328 = vpack.c.b16 %v259, %v256
    %v329 = vpack.c.b16 %v260, %v257
    %v330 = vpack.c.b16 %v261, %v258
    %v331 = vpack.c.b16 %v265, %v262
    %v332 = vpack.c.b16 %v266, %v263
    %v333 = vpack.c.b16 %v267, %v264
    %v334 = vpack.c.b16 %v271, %v268
    %v335 = vpack.c.b16 %v272, %v269
    %v336 = vpack.c.b16 %v273, %v270
    %v337 = vpack.c.b16 %v277, %v274
    %v338 = vpack.c.b16 %v278, %v275
    %v339 = vpack.c.b16 %v279, %v276
    %v340 = vpack.c.b16 %v283, %v280
    %v341 = vpack.c.b16 %v284, %v281
    %v342 = vpack.c.b16 %v285, %v282
    %v343 = vpack.c.b16 %v289, %v286
    %v344 = vpack.c.b16 %v290, %v287
    %v345 = vpack.c.b16 %v291, %v288
    %v346 = vpack.c.b16 %v295, %v292
    %v347 = vpack.c.b16 %v296, %v293
    %v348 = vpack.c.b16 %v297, %v294
    %v349 = vpack.c.b16 %v301, %v298
    %v350 = vpack.c.b16 %v302, %v299
    %v351 = vpack.c.b16 %v303, %v300
    %v420 = vunpack.c.l.b16 %v101
    %v421 = vunpack.c.l.b16 %v102
    %v422 = vunpack.c.l.b16 %v103
    %v423 = vunpack.c.l.b16 %v104
    %v424 = vunpack.c.l.b16 %v105
    %v425 = vunpack.c.l.b16 %v106
    %v426 = vunpack.c.l.b16 %v107
    %v427 = vunpack.c.l.b16 %v108
    %v428 = vunpack.c.l.b16 %v109
    %v429 = vunpack.c.l.b16 %v110
    %v430 = vunpack.c.l.b16 %v111
    %v431 = vunpack.c.l.b16 %v112
    %v432 = vunpack.c.l.b16 %v113
    %v433 = vunpack.c.l.b16 %v114
    %v434 = vunpack.c.l.b16 %v115
    %v435 = vunpack.c.l.b16 %v116
    %v436 = vunpack.c.l.b16 %v117
    %v437 = vunpack.c.l.b16 %v118
    %v438 = vunpack.c.l.b16 %v119
    %v439 = vunpack.c.l.b16 %v120
    %v440 = vunpack.c.l.b16 %v121
    %v441 = vunpack.c.l.b16 %v122
    %v442 = vunpack.c.l.b16 %v123
    %v443 = vunpack.c.l.b16 %v124
    %v444 = vunpack.c.l.b16 %v125
    %v445 = vunpack.c.l.b16 %v126
    %v446 = vunpack.c.l.b16 %v127
    %v447 = vunpack.c.l.b16 %v128
    %v448 = vunpack.c.l.b16 %v129
    %v449 = vunpack.c.l.b16 %v130
    %v450 = vunpack.c.l.b16 %v131
    %v451 = vunpack.c.l.b16 %v132
    %v452 = vunpack.c.l.b16 %v133
    %v453 = vunpack.c.l.b16 %v134
    %v454 = vunpack.c.l.b16 %v135
    %v455 = vunpack.c.l.b16 %v136
    %v456 = vpack.c.b16 %v421, %v420
    %v457 = vpack.c.b16 %v423, %v422
    %v458 = vpack.c.b16 %v425, %v424
    %v459 = vpack.c.b16 %v427, %v426
    %v460 = vpack.c.b16 %v429, %v428
    %v461 = vpack.c.b16 %v431, %v430
    %v462 = vpack.c.b16 %v433, %v432
    %v463 = vpack.c.b16 %v435, %v434
    %v464 = vpack.c.b16 %v437, %v436
    %v465 = vpack.c.b16 %v439, %v438
    %v466 = vpack.c.b16 %v441, %v440
    %v467 = vpack.c.b16 %v443, %v442
    %v468 = vpack.c.b16 %v445, %v444
    %v469 = vpack.c.b16 %v447, %v446
    %v470 = vpack.c.b16 %v449, %v448
    %v471 = vpack.c.b16 %v451, %v450
    %v472 = vpack.c.b16 %v453, %v452
    %v473 = vpack.c.b16 %v455, %v454
    %vm492 = vcmask 261120
    %v494 = vsel %vm492, %v306, 0
    %v497 = vsel %vm492, %v309, 0
    %v500 = vsel %vm492, %v312, 0
    %v503 = vsel %vm492, %v315, 0
    %v506 = vsel %vm492, %v318, 0
    %v509 = vsel %vm492, %v321, 0
    %v512 = vsel %vm492, %v324, 0
    %v515 = vsel %vm492, %v327, 0
    %v518 = vsel %vm492, %v330, 0
    %v521 = vsel %vm492, %v333, 0
    %v524 = vsel %vm492, %v336, 0
    %v527 = vsel %vm492, %v339, 0
    %v530 = vsel %vm492, %v342, 0
    %v533 = vsel %vm492, %v345, 0
    %v536 = vsel %vm492, %v348, 0
    %v539 = vsel %vm492, %v351, 0
    %541 = vmatprep.subr.bf16.mxu0 0
    %542 = vmatpush1.bf16.msra.mxu0 %v463
    %543 = vmatprep.subr.bf16.mxu0 0
    %544 = vmatpush1.bf16.msra.mxu0 %v462
    %545 = vmatprep.subr.bf16.mxu0 0
    %546 = vmatpush1.bf16.msra.mxu0 %v461
    %547 = vmatprep.subr.bf16.mxu0 0
    %548 = vmatpush1.bf16.msra.mxu0 %v460
    %549 = vmatprep.subr.bf16.mxu0 0
    %550 = vmatpush1.bf16.msra.mxu0 %v459
    %551 = vmatprep.subr.bf16.mxu0 0
    %552 = vmatpush1.bf16.msra.mxu0 %v458
    %553 = vmatprep.subr.bf16.mxu0 0
    %554 = vmatpush1.bf16.msra.mxu0 %v457
    %555 = vmatprep.subr.bf16.mxu0 0
    %556 = vmatpush1.bf16.msra.mxu0 %v456
    %557 = vmatprep.subr.bf16.mxu0 0
    %558 = vmatpush2.bf16.msra.mxu0 %v471
    %559 = vmatprep.subr.bf16.mxu0 0
    %560 = vmatpush2.bf16.msra.mxu0 %v470
    %561 = vmatprep.subr.bf16.mxu0 0
    %562 = vmatpush2.bf16.msra.mxu0 %v469
    %563 = vmatprep.subr.bf16.mxu0 0
    %564 = vmatpush2.bf16.msra.mxu0 %v468
    %565 = vmatprep.subr.bf16.mxu0 0
    %566 = vmatpush2.bf16.msra.mxu0 %v467
    %567 = vmatprep.subr.bf16.mxu0 0
    %568 = vmatpush2.bf16.msra.mxu0 %v466
    %569 = vmatprep.subr.bf16.mxu0 0
    %570 = vmatpush2.bf16.msra.mxu0 %v465
    %571 = vmatprep.subr.bf16.mxu0 0
    %572 = vmatpush2.bf16.msra.mxu0 %v464
    %573 = vmatprep.mubr.bf16.mxu0 %v305
    %574 = vmatmul.mubr.bf16.gmra.mxu0 %v304
    %v575 = vpop.f32.mrf.mxu0
    %v576 = vadd.f32 %v142, %v575
    %v577 = vpop.f32.mrf.mxu0
    %v578 = vpop.f32.mrf.mxu0
    %v579 = vadd.f32 %v142, %v578
    %v580 = vpop.f32.mrf.mxu0
    %581 = vmatprep.mubr.bf16.mxu0 %v308
    %582 = vmatmul.mubr.bf16.gmra.mxu0 %v307
    %v583 = vpop.f32.mrf.mxu0
    %v584 = vadd.f32 %v142, %v583
    %v585 = vpop.f32.mrf.mxu0
    %v586 = vpop.f32.mrf.mxu0
    %v587 = vadd.f32 %v142, %v586
    %v588 = vpop.f32.mrf.mxu0
    %589 = vmatprep.mubr.bf16.mxu0 %v311
    %590 = vmatmul.mubr.bf16.gmra.mxu0 %v310
    %v591 = vpop.f32.mrf.mxu0
    %v592 = vadd.f32 %v142, %v591
    %v593 = vpop.f32.mrf.mxu0
    %v594 = vpop.f32.mrf.mxu0
    %v595 = vadd.f32 %v142, %v594
    %v596 = vpop.f32.mrf.mxu0
    %597 = vmatprep.mubr.bf16.mxu0 %v314
    %598 = vmatmul.mubr.bf16.gmra.mxu0 %v313
    %v599 = vpop.f32.mrf.mxu0
    %v600 = vadd.f32 %v142, %v599
    %v601 = vpop.f32.mrf.mxu0
    %v602 = vpop.f32.mrf.mxu0
    %v603 = vadd.f32 %v142, %v602
    %v604 = vpop.f32.mrf.mxu0
    %605 = vmatprep.mubr.bf16.mxu0 %v317
    %606 = vmatmul.mubr.bf16.gmra.mxu0 %v316
    %v607 = vpop.f32.mrf.mxu0
    %v608 = vadd.f32 %v142, %v607
    %v609 = vpop.f32.mrf.mxu0
    %v610 = vpop.f32.mrf.mxu0
    %v611 = vadd.f32 %v142, %v610
    %v612 = vpop.f32.mrf.mxu0
    %613 = vmatprep.mubr.bf16.mxu0 %v320
    %614 = vmatmul.mubr.bf16.gmra.mxu0 %v319
    %v615 = vpop.f32.mrf.mxu0
    %v616 = vadd.f32 %v142, %v615
    %v617 = vpop.f32.mrf.mxu0
    %v618 = vpop.f32.mrf.mxu0
    %v619 = vadd.f32 %v142, %v618
    %v620 = vpop.f32.mrf.mxu0
    %621 = vmatprep.mubr.bf16.mxu0 %v323
    %622 = vmatmul.mubr.bf16.gmra.mxu0 %v322
    %v623 = vpop.f32.mrf.mxu0
    %v624 = vadd.f32 %v142, %v623
    %v625 = vpop.f32.mrf.mxu0
    %v626 = vpop.f32.mrf.mxu0
    %v627 = vadd.f32 %v142, %v626
    %v628 = vpop.f32.mrf.mxu0
    %629 = vmatprep.mubr.bf16.mxu0 %v326
    %630 = vmatmul.mubr.bf16.gmra.mxu0 %v325
    %v631 = vpop.f32.mrf.mxu0
    %v632 = vadd.f32 %v142, %v631
    %v633 = vpop.f32.mrf.mxu0
    %v634 = vpop.f32.mrf.mxu0
    %v635 = vadd.f32 %v142, %v634
    %v636 = vpop.f32.mrf.mxu0
    %637 = vmatprep.mubr.bf16.mxu0 %v329
    %638 = vmatmul.mubr.bf16.gmra.mxu0 %v328
    %v639 = vpop.f32.mrf.mxu0
    %v640 = vadd.f32 %v142, %v639
    %v641 = vpop.f32.mrf.mxu0
    %v642 = vpop.f32.mrf.mxu0
    %v643 = vadd.f32 %v142, %v642
    %v644 = vpop.f32.mrf.mxu0
    %645 = vmatprep.mubr.bf16.mxu0 %v332
    %646 = vmatmul.mubr.bf16.gmra.mxu0 %v331
    %v647 = vpop.f32.mrf.mxu0
    %v648 = vadd.f32 %v142, %v647
    %v649 = vpop.f32.mrf.mxu0
    %v650 = vpop.f32.mrf.mxu0
    %v651 = vadd.f32 %v142, %v650
    %v652 = vpop.f32.mrf.mxu0
    %653 = vmatprep.mubr.bf16.mxu0 %v335
    %654 = vmatmul.mubr.bf16.gmra.mxu0 %v334
    %v655 = vpop.f32.mrf.mxu0
    %v656 = vadd.f32 %v142, %v655
    %v657 = vpop.f32.mrf.mxu0
    %v658 = vpop.f32.mrf.mxu0
    %v659 = vadd.f32 %v142, %v658
    %v660 = vpop.f32.mrf.mxu0
    %661 = vmatprep.mubr.bf16.mxu0 %v338
    %662 = vmatmul.mubr.bf16.gmra.mxu0 %v337
    %v663 = vpop.f32.mrf.mxu0
    %v664 = vadd.f32 %v142, %v663
    %v665 = vpop.f32.mrf.mxu0
    %v666 = vpop.f32.mrf.mxu0
    %v667 = vadd.f32 %v142, %v666
    %v668 = vpop.f32.mrf.mxu0
    %669 = vmatprep.mubr.bf16.mxu0 %v341
    %670 = vmatmul.mubr.bf16.gmra.mxu0 %v340
    %v671 = vpop.f32.mrf.mxu0
    %v672 = vadd.f32 %v142, %v671
    %v673 = vpop.f32.mrf.mxu0
    %v674 = vpop.f32.mrf.mxu0
    %v675 = vadd.f32 %v142, %v674
    %v676 = vpop.f32.mrf.mxu0
    %677 = vmatprep.mubr.bf16.mxu0 %v344
    %678 = vmatmul.mubr.bf16.gmra.mxu0 %v343
    %v679 = vpop.f32.mrf.mxu0
    %v680 = vadd.f32 %v142, %v679
    %v681 = vpop.f32.mrf.mxu0
    %v682 = vpop.f32.mrf.mxu0
    %v683 = vadd.f32 %v142, %v682
    %v684 = vpop.f32.mrf.mxu0
    %685 = vmatprep.mubr.bf16.mxu0 %v347
    %686 = vmatmul.mubr.bf16.gmra.mxu0 %v346
    %v687 = vpop.f32.mrf.mxu0
    %v688 = vadd.f32 %v142, %v687
    %v689 = vpop.f32.mrf.mxu0
    %v690 = vpop.f32.mrf.mxu0
    %v691 = vadd.f32 %v142, %v690
    %v692 = vpop.f32.mrf.mxu0
    %693 = vmatprep.mubr.bf16.mxu0 %v350
    %694 = vmatmul.mubr.bf16.gmra.mxu0 %v349
    %v695 = vpop.f32.mrf.mxu0
    %v696 = vadd.f32 %v142, %v695
    %v697 = vpop.f32.mrf.mxu0
    %v698 = vpop.f32.mrf.mxu0
    %v699 = vadd.f32 %v142, %v698
    %v700 = vpop.f32.mrf.mxu0
    %701 = vdwg.mxu0
    %702 = vmatprep.subr.bf16.mxu0 0
    %703 = vmatpush1.bf16.msra.mxu0 0
    %704 = vmatprep.subr.bf16.mxu0 0
    %705 = vmatpush1.bf16.msra.mxu0 0
    %706 = vmatprep.subr.bf16.mxu0 0
    %707 = vmatpush1.bf16.msra.mxu0 0
    %708 = vmatprep.subr.bf16.mxu0 0
    %709 = vmatpush1.bf16.msra.mxu0 0
    %710 = vmatprep.subr.bf16.mxu0 0
    %711 = vmatpush1.bf16.msra.mxu0 0
    %712 = vmatprep.subr.bf16.mxu0 0
    %713 = vmatpush1.bf16.msra.mxu0 0
    %714 = vmatprep.subr.bf16.mxu0 0
    %715 = vmatpush1.bf16.msra.mxu0 %v473
    %716 = vmatprep.subr.bf16.mxu0 0
    %717 = vmatpush1.bf16.msra.mxu0 %v472
    %718 = vmatprep.subr.bf16.mxu0 0
    %719 = vmatpush2.bf16.msra.mxu0 0
    %720 = vmatprep.subr.bf16.mxu0 0
    %721 = vmatpush2.bf16.msra.mxu0 0
    %722 = vmatprep.subr.bf16.mxu0 0
    %723 = vmatpush2.bf16.msra.mxu0 0
    %724 = vmatprep.subr.bf16.mxu0 0
    %725 = vmatpush2.bf16.msra.mxu0 0
    %726 = vmatprep.subr.bf16.mxu0 0
    %727 = vmatpush2.bf16.msra.mxu0 0
    %728 = vmatprep.subr.bf16.mxu0 0
    %729 = vmatpush2.bf16.msra.mxu0 0
    %730 = vmatprep.subr.bf16.mxu0 0
    %731 = vmatpush2.bf16.msra.mxu0 0
    %732 = vmatprep.subr.bf16.mxu0 0
    %733 = vmatpush2.bf16.msra.mxu0 0
    %734 = vmatprep.mubr.bf16.mxu0 0
    %735 = vmatmul.mubr.bf16.gmra.mxu0 %v494
    %v736 = vpop.f32.mrf.mxu0
    %v737 = vadd.f32 %v576, %v736
    %v738 = vpop.f32.mrf.mxu0
    %v739 = vpop.f32.mrf.mxu0
    %v740 = vadd.f32 %v579, %v739
    %v741 = vpop.f32.mrf.mxu0
    %742 = vmatprep.mubr.bf16.mxu0 0
    %743 = vmatmul.mubr.bf16.gmra.mxu0 %v497
    %v744 = vpop.f32.mrf.mxu0
    %v745 = vadd.f32 %v584, %v744
    %v746 = vpop.f32.mrf.mxu0
    %v747 = vpop.f32.mrf.mxu0
    %v748 = vadd.f32 %v587, %v747
    %v749 = vpop.f32.mrf.mxu0
    %750 = vmatprep.mubr.bf16.mxu0 0
    %751 = vmatmul.mubr.bf16.gmra.mxu0 %v500
    %v752 = vpop.f32.mrf.mxu0
    %v753 = vadd.f32 %v592, %v752
    %v754 = vpop.f32.mrf.mxu0
    %v755 = vpop.f32.mrf.mxu0
    %v756 = vadd.f32 %v595, %v755
    %v757 = vpop.f32.mrf.mxu0
    %758 = vmatprep.mubr.bf16.mxu0 0
    %759 = vmatmul.mubr.bf16.gmra.mxu0 %v503
    %v760 = vpop.f32.mrf.mxu0
    %v761 = vadd.f32 %v600, %v760
    %v762 = vpop.f32.mrf.mxu0
    %v763 = vpop.f32.mrf.mxu0
    %v764 = vadd.f32 %v603, %v763
    %v765 = vpop.f32.mrf.mxu0
    %766 = vmatprep.mubr.bf16.mxu0 0
    %767 = vmatmul.mubr.bf16.gmra.mxu0 %v506
    %v768 = vpop.f32.mrf.mxu0
    %v769 = vadd.f32 %v608, %v768
    %v770 = vpop.f32.mrf.mxu0
    %v771 = vpop.f32.mrf.mxu0
    %v772 = vadd.f32 %v611, %v771
    %v773 = vpop.f32.mrf.mxu0
    %774 = vmatprep.mubr.bf16.mxu0 0
    %775 = vmatmul.mubr.bf16.gmra.mxu0 %v509
    %v776 = vpop.f32.mrf.mxu0
    %v777 = vadd.f32 %v616, %v776
    %v778 = vpop.f32.mrf.mxu0
    %v779 = vpop.f32.mrf.mxu0
    %v780 = vadd.f32 %v619, %v779
    %v781 = vpop.f32.mrf.mxu0
    %782 = vmatprep.mubr.bf16.mxu0 0
    %783 = vmatmul.mubr.bf16.gmra.mxu0 %v512
    %v784 = vpop.f32.mrf.mxu0
    %v785 = vadd.f32 %v624, %v784
    %v786 = vpop.f32.mrf.mxu0
    %v787 = vpop.f32.mrf.mxu0
    %v788 = vadd.f32 %v627, %v787
    %v789 = vpop.f32.mrf.mxu0
    %790 = vmatprep.mubr.bf16.mxu0 0
    %791 = vmatmul.mubr.bf16.gmra.mxu0 %v515
    %v792 = vpop.f32.mrf.mxu0
    %v793 = vadd.f32 %v632, %v792
    %v794 = vpop.f32.mrf.mxu0
    %v795 = vpop.f32.mrf.mxu0
    %v796 = vadd.f32 %v635, %v795
    %v797 = vpop.f32.mrf.mxu0
    %798 = vmatprep.mubr.bf16.mxu0 0
    %799 = vmatmul.mubr.bf16.gmra.mxu0 %v518
    %v800 = vpop.f32.mrf.mxu0
    %v801 = vadd.f32 %v640, %v800
    %v802 = vpop.f32.mrf.mxu0
    %v803 = vpop.f32.mrf.mxu0
    %v804 = vadd.f32 %v643, %v803
    %v805 = vpop.f32.mrf.mxu0
    %806 = vmatprep.mubr.bf16.mxu0 0
    %807 = vmatmul.mubr.bf16.gmra.mxu0 %v521
    %v808 = vpop.f32.mrf.mxu0
    %v809 = vadd.f32 %v648, %v808
    %v810 = vpop.f32.mrf.mxu0
    %v811 = vpop.f32.mrf.mxu0
    %v812 = vadd.f32 %v651, %v811
    %v813 = vpop.f32.mrf.mxu0
    %814 = vmatprep.mubr.bf16.mxu0 0
    %815 = vmatmul.mubr.bf16.gmra.mxu0 %v524
    %v816 = vpop.f32.mrf.mxu0
    %v817 = vadd.f32 %v656, %v816
    %v818 = vpop.f32.mrf.mxu0
    %v819 = vpop.f32.mrf.mxu0
    %v820 = vadd.f32 %v659, %v819
    %v821 = vpop.f32.mrf.mxu0
    %822 = vmatprep.mubr.bf16.mxu0 0
    %823 = vmatmul.mubr.bf16.gmra.mxu0 %v527
    %v824 = vpop.f32.mrf.mxu0
    %v825 = vadd.f32 %v664, %v824
    %v826 = vpop.f32.mrf.mxu0
    %v827 = vpop.f32.mrf.mxu0
    %v828 = vadd.f32 %v667, %v827
    %v829 = vpop.f32.mrf.mxu0
    %830 = vmatprep.mubr.bf16.mxu0 0
    %831 = vmatmul.mubr.bf16.gmra.mxu0 %v530
    %v832 = vpop.f32.mrf.mxu0
    %v833 = vadd.f32 %v672, %v832
    %v834 = vpop.f32.mrf.mxu0
    %v835 = vpop.f32.mrf.mxu0
    %v836 = vadd.f32 %v675, %v835
    %v837 = vpop.f32.mrf.mxu0
    %838 = vmatprep.mubr.bf16.mxu0 0
    %839 = vmatmul.mubr.bf16.gmra.mxu0 %v533
    %v840 = vpop.f32.mrf.mxu0
    %v841 = vadd.f32 %v680, %v840
    %v842 = vpop.f32.mrf.mxu0
    %v843 = vpop.f32.mrf.mxu0
    %v844 = vadd.f32 %v683, %v843
    %v845 = vpop.f32.mrf.mxu0
    %846 = vmatprep.mubr.bf16.mxu0 0
    %847 = vmatmul.mubr.bf16.gmra.mxu0 %v536
    %v848 = vpop.f32.mrf.mxu0
    %v849 = vadd.f32 %v688, %v848
    %v850 = vpop.f32.mrf.mxu0
    %v851 = vpop.f32.mrf.mxu0
    %v852 = vadd.f32 %v691, %v851
    %v853 = vpop.f32.mrf.mxu0
    %854 = vmatprep.mubr.bf16.mxu0 0
    %855 = vmatmul.mubr.bf16.gmra.mxu0 %v539
    %v856 = vpop.f32.mrf.mxu0
    %v857 = vadd.f32 %v696, %v856
    %v858 = vpop.f32.mrf.mxu0
    %v859 = vpop.f32.mrf.mxu0
    %v860 = vadd.f32 %v699, %v859
    %v861 = vpop.f32.mrf.mxu0
    %862 = vdwg.mxu0
    %v863 = vmul.f32 %v737, 0.2
    %v864 = vmul.f32 %v740, 0.2
    %v865 = vmul.f32 %v745, 0.2
    %v866 = vmul.f32 %v748, 0.2
    %v867 = vmul.f32 %v753, 0.2
    %v868 = vmul.f32 %v756, 0.2
    %v869 = vmul.f32 %v761, 0.2
    %v870 = vmul.f32 %v764, 0.2
    %v871 = vmul.f32 %v769, 0.2
    %v872 = vmul.f32 %v772, 0.2
    %v873 = vmul.f32 %v777, 0.2
    %v874 = vmul.f32 %v780, 0.2
    %v875 = vmul.f32 %v785, 0.2
    %v876 = vmul.f32 %v788, 0.2
    %v877 = vmul.f32 %v793, 0.2
    %v878 = vmul.f32 %v796, 0.2
    %v879 = vmul.f32 %v801, 0.2
    %v880 = vmul.f32 %v804, 0.2
    %v881 = vmul.f32 %v809, 0.2
    %v882 = vmul.f32 %v812, 0.2
    %v883 = vmul.f32 %v817, 0.2
    %v884 = vmul.f32 %v820, 0.2
    %v885 = vmul.f32 %v825, 0.2
    %v886 = vmul.f32 %v828, 0.2
    %v887 = vmul.f32 %v833, 0.2
    %v888 = vmul.f32 %v836, 0.2
    %v889 = vmul.f32 %v841, 0.2
    %v890 = vmul.f32 %v844, 0.2
    %v891 = vmul.f32 %v849, 0.2
    %v892 = vmul.f32 %v852, 0.2
    %v893 = vmul.f32 %v857, 0.2
    %v894 = vmul.f32 %v860, 0.2
    %v895 = vmax.f32 %v737, %v863
    %v896 = vmax.f32 %v740, %v864
    %v897 = vmax.f32 %v745, %v865
    %v898 = vmax.f32 %v748, %v866
    %v899 = vmax.f32 %v753, %v867
    %v900 = vmax.f32 %v756, %v868
    %v901 = vmax.f32 %v761, %v869
    %v902 = vmax.f32 %v764, %v870
    %v903 = vmax.f32 %v769, %v871
    %v904 = vmax.f32 %v772, %v872
    %v905 = vmax.f32 %v777, %v873
    %v906 = vmax.f32 %v780, %v874
    %v907 = vmax.f32 %v785, %v875
    %v908 = vmax.f32 %v788, %v876
    %v909 = vmax.f32 %v793, %v877
    %v910 = vmax.f32 %v796, %v878
    %v911 = vmax.f32 %v801, %v879
    %v912 = vmax.f32 %v804, %v880
    %v913 = vmax.f32 %v809, %v881
    %v914 = vmax.f32 %v812, %v882
    %v915 = vmax.f32 %v817, %v883
    %v916 = vmax.f32 %v820, %v884
    %v917 = vmax.f32 %v825, %v885
    %v918 = vmax.f32 %v828, %v886
    %v919 = vmax.f32 %v833, %v887
    %v920 = vmax.f32 %v836, %v888
    %v921 = vmax.f32 %v841, %v889
    %v922 = vmax.f32 %v844, %v890
    %v923 = vmax.f32 %v849, %v891
    %v924 = vmax.f32 %v852, %v892
    %v925 = vmax.f32 %v857, %v893
    %v926 = vmax.f32 %v860, %v894
    %v927 = vld [vmem:[%s3] sm:$0xff]
    %v928 = vld [vmem:[%s3 + $0x8] sm:$0xff]
    %v929 = vmul.f32 %v895, %v927
    %v930 = vmul.f32 %v896, %v928
    %v931 = vmul.f32 %v897, %v927
    %v932 = vmul.f32 %v898, %v928
    %v933 = vmul.f32 %v899, %v927
    %v934 = vmul.f32 %v900, %v928
    %v935 = vmul.f32 %v901, %v927
    %v936 = vmul.f32 %v902, %v928
    %v937 = vmul.f32 %v903, %v927
    %v938 = vmul.f32 %v904, %v928
    %v939 = vmul.f32 %v905, %v927
    %v940 = vmul.f32 %v906, %v928
    %v941 = vmul.f32 %v907, %v927
    %v942 = vmul.f32 %v908, %v928
    %v943 = vmul.f32 %v909, %v927
    %v944 = vmul.f32 %v910, %v928
    %v945 = vmul.f32 %v911, %v927
    %v946 = vmul.f32 %v912, %v928
    %v947 = vmul.f32 %v913, %v927
    %v948 = vmul.f32 %v914, %v928
    %v949 = vmul.f32 %v915, %v927
    %v950 = vmul.f32 %v916, %v928
    %v951 = vmul.f32 %v917, %v927
    %v952 = vmul.f32 %v918, %v928
    %v953 = vmul.f32 %v919, %v927
    %v954 = vmul.f32 %v920, %v928
    %v955 = vmul.f32 %v921, %v927
    %v956 = vmul.f32 %v922, %v928
    %v957 = vmul.f32 %v923, %v927
    %v958 = vmul.f32 %v924, %v928
    %v959 = vmul.f32 %v925, %v927
    %v960 = vmul.f32 %v926, %v928
    %v961 = vsel %vm492, %v929, 0.0
    %v962 = vsel %vm492, %v930, 0.0
    %v963 = vadd.f32 %v961, %v962
    %v964 = vrot.slane %v963, 4
    %v965 = vadd.f32 %v963, %v964
    %v966 = vrot.slane %v965, 2
    %v967 = vadd.f32 %v965, %v966
    %v968 = vrot.slane %v967, 1
    %v969 = vadd.f32 %v967, %v968
    %v970 = vsel %vm492, %v931, 0.0
    %v971 = vsel %vm492, %v932, 0.0
    %v972 = vadd.f32 %v970, %v971
    %v973 = vrot.slane %v972, 4
    %v974 = vadd.f32 %v972, %v973
    %v975 = vrot.slane %v974, 2
    %v976 = vadd.f32 %v974, %v975
    %v977 = vrot.slane %v976, 1
    %v978 = vadd.f32 %v976, %v977
    %v979 = vsel %vm492, %v933, 0.0
    %v980 = vsel %vm492, %v934, 0.0
    %v981 = vadd.f32 %v979, %v980
    %v982 = vrot.slane %v981, 4
    %v983 = vadd.f32 %v981, %v982
    %v984 = vrot.slane %v983, 2
    %v985 = vadd.f32 %v983, %v984
    %v986 = vrot.slane %v985, 1
    %v987 = vadd.f32 %v985, %v986
    %v988 = vsel %vm492, %v935, 0.0
    %v989 = vsel %vm492, %v936, 0.0
    %v990 = vadd.f32 %v988, %v989
    %v991 = vrot.slane %v990, 4
    %v992 = vadd.f32 %v990, %v991
    %v993 = vrot.slane %v992, 2
    %v994 = vadd.f32 %v992, %v993
    %v995 = vrot.slane %v994, 1
    %v996 = vadd.f32 %v994, %v995
    %v997 = vsel %vm492, %v937, 0.0
    %v998 = vsel %vm492, %v938, 0.0
    %v999 = vadd.f32 %v997, %v998
    %v1000 = vrot.slane %v999, 4
    %v1001 = vadd.f32 %v999, %v1000
    %v1002 = vrot.slane %v1001, 2
    %v1003 = vadd.f32 %v1001, %v1002
    %v1004 = vrot.slane %v1003, 1
    %v1005 = vadd.f32 %v1003, %v1004
    %v1006 = vsel %vm492, %v939, 0.0
    %v1007 = vsel %vm492, %v940, 0.0
    %v1008 = vadd.f32 %v1006, %v1007
    %v1009 = vrot.slane %v1008, 4
    %v1010 = vadd.f32 %v1008, %v1009
    %v1011 = vrot.slane %v1010, 2
    %v1012 = vadd.f32 %v1010, %v1011
    %v1013 = vrot.slane %v1012, 1
    %v1014 = vadd.f32 %v1012, %v1013
    %v1015 = vsel %vm492, %v941, 0.0
    %v1016 = vsel %vm492, %v942, 0.0
    %v1017 = vadd.f32 %v1015, %v1016
    %v1018 = vrot.slane %v1017, 4
    %v1019 = vadd.f32 %v1017, %v1018
    %v1020 = vrot.slane %v1019, 2
    %v1021 = vadd.f32 %v1019, %v1020
    %v1022 = vrot.slane %v1021, 1
    %v1023 = vadd.f32 %v1021, %v1022
    %v1024 = vsel %vm492, %v943, 0.0
    %v1025 = vsel %vm492, %v944, 0.0
    %v1026 = vadd.f32 %v1024, %v1025
    %v1027 = vrot.slane %v1026, 4
    %v1028 = vadd.f32 %v1026, %v1027
    %v1029 = vrot.slane %v1028, 2
    %v1030 = vadd.f32 %v1028, %v1029
    %v1031 = vrot.slane %v1030, 1
    %v1032 = vadd.f32 %v1030, %v1031
    %v1033 = vsel %vm492, %v945, 0.0
    %v1034 = vsel %vm492, %v946, 0.0
    %v1035 = vadd.f32 %v1033, %v1034
    %v1036 = vrot.slane %v1035, 4
    %v1037 = vadd.f32 %v1035, %v1036
    %v1038 = vrot.slane %v1037, 2
    %v1039 = vadd.f32 %v1037, %v1038
    %v1040 = vrot.slane %v1039, 1
    %v1041 = vadd.f32 %v1039, %v1040
    %v1042 = vsel %vm492, %v947, 0.0
    %v1043 = vsel %vm492, %v948, 0.0
    %v1044 = vadd.f32 %v1042, %v1043
    %v1045 = vrot.slane %v1044, 4
    %v1046 = vadd.f32 %v1044, %v1045
    %v1047 = vrot.slane %v1046, 2
    %v1048 = vadd.f32 %v1046, %v1047
    %v1049 = vrot.slane %v1048, 1
    %v1050 = vadd.f32 %v1048, %v1049
    %v1051 = vsel %vm492, %v949, 0.0
    %v1052 = vsel %vm492, %v950, 0.0
    %v1053 = vadd.f32 %v1051, %v1052
    %v1054 = vrot.slane %v1053, 4
    %v1055 = vadd.f32 %v1053, %v1054
    %v1056 = vrot.slane %v1055, 2
    %v1057 = vadd.f32 %v1055, %v1056
    %v1058 = vrot.slane %v1057, 1
    %v1059 = vadd.f32 %v1057, %v1058
    %v1060 = vsel %vm492, %v951, 0.0
    %v1061 = vsel %vm492, %v952, 0.0
    %v1062 = vadd.f32 %v1060, %v1061
    %v1063 = vrot.slane %v1062, 4
    %v1064 = vadd.f32 %v1062, %v1063
    %v1065 = vrot.slane %v1064, 2
    %v1066 = vadd.f32 %v1064, %v1065
    %v1067 = vrot.slane %v1066, 1
    %v1068 = vadd.f32 %v1066, %v1067
    %v1069 = vsel %vm492, %v953, 0.0
    %v1070 = vsel %vm492, %v954, 0.0
    %v1071 = vadd.f32 %v1069, %v1070
    %v1072 = vrot.slane %v1071, 4
    %v1073 = vadd.f32 %v1071, %v1072
    %v1074 = vrot.slane %v1073, 2
    %v1075 = vadd.f32 %v1073, %v1074
    %v1076 = vrot.slane %v1075, 1
    %v1077 = vadd.f32 %v1075, %v1076
    %v1078 = vsel %vm492, %v955, 0.0
    %v1079 = vsel %vm492, %v956, 0.0
    %v1080 = vadd.f32 %v1078, %v1079
    %v1081 = vrot.slane %v1080, 4
    %v1082 = vadd.f32 %v1080, %v1081
    %v1083 = vrot.slane %v1082, 2
    %v1084 = vadd.f32 %v1082, %v1083
    %v1085 = vrot.slane %v1084, 1
    %v1086 = vadd.f32 %v1084, %v1085
    %v1087 = vsel %vm492, %v957, 0.0
    %v1088 = vsel %vm492, %v958, 0.0
    %v1089 = vadd.f32 %v1087, %v1088
    %v1090 = vrot.slane %v1089, 4
    %v1091 = vadd.f32 %v1089, %v1090
    %v1092 = vrot.slane %v1091, 2
    %v1093 = vadd.f32 %v1091, %v1092
    %v1094 = vrot.slane %v1093, 1
    %v1095 = vadd.f32 %v1093, %v1094
    %v1096 = vsel %vm492, %v959, 0.0
    %v1097 = vsel %vm492, %v960, 0.0
    %v1098 = vadd.f32 %v1096, %v1097
    %v1099 = vrot.slane %v1098, 4
    %v1100 = vadd.f32 %v1098, %v1099
    %v1101 = vrot.slane %v1100, 2
    %v1102 = vadd.f32 %v1100, %v1101
    %v1103 = vrot.slane %v1102, 1
    %v1104 = vadd.f32 %v1102, %v1103
    %vm1121 = vcmask 1041409
    %v1122 = vsel %vm1121, %v978, %v969
    %vm1123 = vcmask 1042434
    %v1124 = vsel %vm1123, %v987, %v1122
    %vm1125 = vcmask 1043459
    %v1126 = vsel %vm1125, %v996, %v1124
    %vm1127 = vcmask 1044484
    %v1128 = vsel %vm1127, %v1005, %v1126
    %vm1129 = vcmask 1045509
    %v1130 = vsel %vm1129, %v1014, %v1128
    %vm1131 = vcmask 1046534
    %v1132 = vsel %vm1131, %v1023, %v1130
    %vm1133 = vcmask 1047559
    %v1134 = vsel %vm1133, %v1032, %v1132
    %v1135 = vsel %vm1121, %v1050, %v1041
    %v1136 = vsel %vm1123, %v1059, %v1135
    %v1137 = vsel %vm1125, %v1068, %v1136
    %v1138 = vsel %vm1127, %v1077, %v1137
    %v1139 = vsel %vm1129, %v1086, %v1138
    %v1140 = vsel %vm1131, %v1095, %v1139
    %v1141 = vsel %vm1133, %v1104, %v1140
    %v1144 = vsel %vm492, %v1134, 0.0
    %1145 = vadd.xlane.f32.xlu0 %v1144
    %v1146 = vpop.xlane.xlu0 %1145
    %v1147 = vsel %vm492, %v1141, 0.0
    %1148 = vadd.xlane.f32.xlu0 %v1147
    %v1149 = vpop.xlane.xlu0 %1148
    %v1150 = vld [vmem:[#allocation2] sm:$0x1]
    %v1152 = vlaneseq
    %v1153 = vshrl.u32 %v1152, 7
    %v1154 = vsub.s32 0, %v1153
    %v1155 = vrot.slane %v1150, %v1154
    %v1157 = vadd.f32 %v1146, %v1155
    %v1158 = vadd.f32 %v1149, %v1155
    %vm1159 = vcmask 7168
    %1160 = vst.msk [vmem:[%s5] sm:$0xff] %vm1159, %v1157
    %1161 = vst.msk [vmem:[%s5 + $0x8] sm:$0xff] %vm1159, %v1158
    // Predicated region
    $region26: #{tpu_custom_call.1} parent=1 // pred_check
      _
    $region27: #{tpu_custom_call.1} parent=1 // pred_check_branch
      %1163 = sbr.rel (0) target = $region29
    $region28: #{tpu_custom_call.1} parent=1 // pred_region
      _
    $region29: #{tpu_custom_call.1} parent=1 // pred_fallthru
      _
    // Predicated region
    $region30: #{tpu_custom_call.1} parent=1 // pred_check
      _
    $region31: #{tpu_custom_call.1} parent=1 // pred_check_branch
      %1165 = sbr.rel (0) target = $region33
    $region32: #{tpu_custom_call.1} parent=1 // pred_region
      _
    $region33: #{tpu_custom_call.1} parent=1 // pred_fallthru
      _
    %1166 = vsyncpa [#allocation4], 1

</llo_original>
